<compile_context>
chip_gen: v6e
topology: v6e:2x2x1
jax: 0.10.0
libtpu: 0.0.40
codegen_flags: <defaults>
</compile_context>

<pallas_src>
import math

import jax
import jax.numpy as jnp
from jax.experimental import pallas as pl
from jax.experimental.pallas import tpu as pltpu


# ---------------------------------------------------------------------------
# PE table (matches the PyTorch buffer: pe[:, 0::2] = sin, pe[:, 1::2] = cos).
# Precomputed once in plain JAX (equivalent of the registered buffer).
# ---------------------------------------------------------------------------
def make_pe_table(size: int, max_len: int = 5000) -> jnp.ndarray:
    if size % 2 != 0:
        raise ValueError(
            "Cannot use sin/cos positional encoding with odd dim (got dim={:d})".format(size)
        )
    position = jnp.arange(0, max_len, dtype=jnp.float32)[:, None]            # (max_len, 1)
    div_term = jnp.exp(
        jnp.arange(0, size, 2, dtype=jnp.float32) * -(math.log(10000.0) / size)
    )                                                                         # (size/2,)
    angles = position * div_term                                              # (max_len, size/2)
    pe = jnp.stack([jnp.sin(angles), jnp.cos(angles)], axis=-1).reshape(max_len, size)
    return pe.astype(jnp.float32)


# ---------------------------------------------------------------------------
# Kernel: out = emb + pe.  pe broadcasts over sublanes when its block height is 1.
# The add is performed in f32 (pe is kept f32) and downcast to the output dtype.
# ---------------------------------------------------------------------------
def _add_pe_kernel(emb_ref, pe_ref, out_ref):
    out_ref[...] = (emb_ref[...].astype(jnp.float32) + pe_ref[...]).astype(out_ref.dtype)


# ---------------------------------------------------------------------------
# Tiling helpers.
# ---------------------------------------------------------------------------
def _round_down(x: int, m: int) -> int:
    return (x // m) * m


def _round_up(x: int, m: int) -> int:
    return ((x + m - 1) // m) * m


def _sublane_pack(itemsize: int) -> int:
    """Rows per vreg: 8 for 4-byte, 16 for 2-byte, 32 for 1-byte dtypes."""
    return 8 * max(1, 4 // max(1, itemsize))


def _target_block_bytes() -> int:
    """Per-block size target by chip generation (mem-bound add)."""
    try:
        kind = jax.devices()[0].device_kind.lower()
    except Exception:
        kind = ""
    if "v7" in kind:
        return 6 * 1024 * 1024        # amortize ~0.35us/step overhead at 3.2 TB/s HBM
    if "v6" in kind or "trillium" in kind:
        return 4 * 1024 * 1024
    return 3 * 1024 * 1024            # v5e (16 MiB scoped default) & conservative fallback


def _split_lanes(lanes: int, rows_for_budget: int, itemsize: int, target_bytes: int) -> int:
    """Lane tile: full extent, or a near-equal split into multiples of 128."""
    if lanes <= 128:
        return lanes
    lane_cap = max(128, _round_down(target_bytes // max(1, rows_for_budget * itemsize), 128))
    if lanes <= lane_cap:
        return lanes                  # full extent is always a legal block dim
    n_chunks = pl.cdiv(lanes, lane_cap)
    return max(128, _round_up(pl.cdiv(lanes, n_chunks), 128))


def _vmem_limit_bytes(emb_block, emb_itemsize, pe_block, pe_itemsize) -> int:
    emb_bytes = emb_block[0] * emb_block[1] * emb_itemsize
    pe_bytes = pe_block[0] * pe_block[1] * pe_itemsize
    # emb-in + out, double-buffered, + double-buffered pe tile, + headroom.
    budget = 2 * 2 * emb_bytes + 2 * pe_bytes + (2 << 20)
    return int(min(max(budget, 16 << 20), 48 << 20))


# ---------------------------------------------------------------------------
# Wrapper.
# ---------------------------------------------------------------------------
def positional_encoding(emb: jnp.ndarray, pe_table: jnp.ndarray) -> jnp.ndarray:
    """emb: (B, T, D); pe_table: (max_len, D). Returns emb + pe[:T] broadcast over batch."""
    B, T, D = emb.shape
    max_len, pe_dim = pe_table.shape
    if T > max_len:
        raise ValueError(f"sequence length {T} exceeds positional-encoding max_len {max_len}")
    if pe_dim != D:
        raise ValueError(f"pe table dim {pe_dim} does not match embedding dim {D}")

    itemsize = jnp.dtype(emb.dtype).itemsize
    pack = _sublane_pack(itemsize)
    target = _target_block_bytes()
    pe_slice = pe_table[:T, :].astype(jnp.float32)   # keep f32; add done in f32 in-kernel

    use_row_fold = (B < pack) and (D % 128 == 0) and (T % pack == 0)

    if not use_row_fold:
        # ---- Path A: lane-dense flattening (B, T*D); pe broadcast over sublanes. ----
        L = T * D
        emb2 = emb.reshape(B, L)
        pe2 = pe_slice.reshape(1, L)

        rows_for_budget = B if B <= pack else pack
        tile_l = _split_lanes(L, rows_for_budget, itemsize, target)
        n_l = pl.cdiv(L, tile_l)

        rows_cap = max(pack, target // max(1, tile_l * itemsize))
        if B <= rows_cap:
            tile_b = B                                   # full extent (legal for any B)
        else:
            tile_b = max(pack, _round_down(rows_cap, pack))   # dtype-aware sublane rounding
        n_b = pl.cdiv(B, tile_b)

        # Shard the lane-tile axis across TensorCores when it has work; keep the
        # batch axis innermost so the pe tile's DMA is skipped across b steps.
        sem = ("parallel", "arbitrary") if n_l >= 2 else ("arbitrary", "parallel")

        out2 = pl.pallas_call(
            _add_pe_kernel,
            out_shape=jax.ShapeDtypeStruct((B, L), emb.dtype),
            grid_spec=pltpu.PrefetchScalarGridSpec(
                num_scalar_prefetch=0,
                grid=(n_l, n_b),
                in_specs=[
                    pl.BlockSpec((tile_b, tile_l), lambda l, b: (b, l)),   # emb tile
                    pl.BlockSpec((1, tile_l), lambda l, b: (0, l)),        # pe tile (b-invariant)
                ],
                out_specs=pl.BlockSpec((tile_b, tile_l), lambda l, b: (b, l)),
            ),
            compiler_params=pltpu.CompilerParams(
                dimension_semantics=sem,
                vmem_limit_bytes=_vmem_limit_bytes((tile_b, tile_l), itemsize, (1, tile_l), 4),
            ),
        )(emb2, pe2)
        return out2.reshape(B, T, D)

    # ---- Path B: small batch, lane-dense D -> fold the sequence axis into sublanes. ----
    R = B * T
    emb2 = emb.reshape(R, D)
    pe2 = pe_slice                                        # (T, D)

    tile_d = _split_lanes(D, pack, itemsize, target)
    n_d = pl.cdiv(D, tile_d)

    rows_cap = max(pack, target // max(1, tile_d * itemsize))
    # Largest multiple of `pack` that divides T and fits the row budget (tile rows
    # never straddle a batch boundary, so pe-block cycling stays aligned).
    tile_r = pack
    r = pack
    while r <= T:
        if T % r == 0 and r <= rows_cap:
            tile_r = r
        r += pack
    n_r = R // tile_r
    n_t = T // tile_r

    if n_t == 1:
        pe_map = lambda d, r: (0, d)                      # r-invariant -> pe DMA skipped
    else:
        pe_map = lambda d, r: (r % n_t, d)

    sem = ("parallel", "arbitrary") if n_d >= 2 else ("arbitrary", "parallel")

    out2 = pl.pallas_call(
        _add_pe_kernel,
        out_shape=jax.ShapeDtypeStruct((R, D), emb.dtype),
        grid_spec=pltpu.PrefetchScalarGridSpec(
            num_scalar_prefetch=0,
            grid=(n_d, n_r),
            in_specs=[
                pl.BlockSpec((tile_r, tile_d), lambda d, r: (r, d)),      # emb tile
                pl.BlockSpec((tile_r, tile_d), pe_map),                   # pe tile
            ],
            out_specs=pl.BlockSpec((tile_r, tile_d), lambda d, r: (r, d)),
        ),
        compiler_params=pltpu.CompilerParams(
            dimension_semantics=sem,
            vmem_limit_bytes=_vmem_limit_bytes((tile_r, tile_d), itemsize, (tile_r, tile_d), 4),
        ),
    )(emb2, pe2)
    return out2.reshape(B, T, D)


if __name__ == "__main__":
    key = jax.random.PRNGKey(0)

    # Path A exercise (batch=2, seq=8, hidden=32 — D not a multiple of 128).
    B, T, D = 2, 8, 32
    MAX_LEN = 16
    pe_table = make_pe_table(size=D, max_len=MAX_LEN)
    emb = jax.random.normal(key, (B, T, D), dtype=jnp.float32)
    out = jax.block_until_ready(positional_encoding(emb, pe_table))
    ref = emb + pe_table[None, :T, :]
    assert out.shape == (B, T, D)
    assert jnp.allclose(out, ref, atol=1e-6), "path A mismatch vs reference"

    # Path B exercise (batch=2, seq=8, hidden=128 — seq folded into sublanes).
    B2, T2, D2 = 2, 8, 128
    pe_table2 = make_pe_table(size=D2, max_len=MAX_LEN)
    emb_b = jax.random.normal(jax.random.fold_in(key, 1), (B2, T2, D2), dtype=jnp.float32)
    out_b = jax.block_until_ready(positional_encoding(emb_b, pe_table2))
    ref_b = emb_b + pe_table2[None, :T2, :]
    assert out_b.shape == (B2, T2, D2)
    assert jnp.allclose(out_b, ref_b, atol=1e-6), "path B mismatch vs reference"

    print("KERNEL_OK")
</pallas_src>

<mosaic_0001>
module attributes {stable_mosaic.version = 11 : i64} {
  func.func @_add_pe_kernel(%arg0: i32, %arg1: i32, %arg2: memref<2x256xf32, #tpu.memory_space<vmem>>, %arg3: memref<1x256xf32, #tpu.memory_space<vmem>>, %arg4: memref<2x256xf32, #tpu.memory_space<vmem>>) attributes {dimension_semantics = [#tpu.dimension_semantics<arbitrary>, #tpu.dimension_semantics<parallel>], iteration_bounds = array<i64: 1, 1>, scalar_prefetch = 0 : i64, scratch_operands = 0 : i64, tpu.core_type = #tpu.core_type<tc>, window_params = [{transform_indices = @transform_0, window_bounds = array<i64: 2, 256>}, {transform_indices = @transform_1, window_bounds = array<i64: 1, 256>}, {transform_indices = @transform_2, window_bounds = array<i64: 2, 256>}]} {
    %c0 = arith.constant 0 : index
    %c0_0 = arith.constant 0 : index
    %0 = vector.load %arg2[%c0, %c0_0] : memref<2x256xf32, #tpu.memory_space<vmem>>, vector<2x256xf32>
    %c0_1 = arith.constant 0 : index
    %c0_2 = arith.constant 0 : index
    %1 = vector.load %arg3[%c0_1, %c0_2] : memref<1x256xf32, #tpu.memory_space<vmem>>, vector<1x256xf32>
    %2 = vector.broadcast %1 : vector<1x256xf32> to vector<2x256xf32>
    %3 = arith.addf %0, %2 : vector<2x256xf32>
    %c0_3 = arith.constant 0 : index
    %c0_4 = arith.constant 0 : index
    %4 = vector.load %arg4[%c0_3, %c0_4] : memref<2x256xf32, #tpu.memory_space<vmem>>, vector<2x256xf32>
    tpu.vector_store %arg4[%c0_3, %c0_4], %3 {strides = array<i32>} : memref<2x256xf32, #tpu.memory_space<vmem>>, vector<2x256xf32>,
    return
  }
  func.func @transform_0(%arg0: i32, %arg1: i32) -> (i32, i32) {
    %c0_i32 = arith.constant 0 : i32
    return %arg1, %arg0 : i32, i32
  }
  func.func @transform_1(%arg0: i32, %arg1: i32) -> (i32, i32) {
    %c0_i32 = arith.constant 0 : i32
    %c0_i32_0 = arith.constant 0 : i32
    return %c0_i32, %arg0 : i32, i32
  }
  func.func @transform_2(%arg0: i32, %arg1: i32) -> (i32, i32) {
    %c0_i32 = arith.constant 0 : i32
    return %arg1, %arg0 : i32, i32
  }
}

</mosaic_0001>

<llo_original>
// kernel: tpu_custom_call.1
$region0: #{tpu_custom_call.1}
  #allocation0 [shape = 'u32[]', space=smem, size = 0x4, offset = 0x4, fixed_abs, tag = 'smem constant byte address 0x4 - core index']
  #allocation1 [shape = 'u32[144,128]{1,0:T(1,128)}', space=vmem, size = 0x12000, scoped, tag = 'internal scratch']
  %s0 = inlined_call_operand.hbm [shape: f32[2,256], index: 0, kind: input, shape index: {}]
  %s1 = inlined_call_operand.hbm [shape: f32[1,256], index: 1, kind: input, shape index: {}]
  %s2 = inlined_call_operand.hbm [shape: f32[2,256], index: 2, kind: output, shape index: {}]
  %s3 = sld [smem:[#allocation0]]
  $region26: #{tpu_custom_call.1} parent=0
    _
  %s5 = ssub.s32 1, %s3
  %s6 = scalar_select 0, %s5, %s3
  $region1: #{tpu_custom_call.1} parent=0
    #allocation2 [shape = 'u8[2048]{0}', space=vmem, size = 0x800, scoped, tag = 'input window, operand 0, single buffered']
    #allocation3 [shape = 's32[1]{0}', space=sflag, size = 0x4, scoped, tag = 'scoped memory for tpu_custom_call.1']
    #allocation4 [shape = 's32[1]{0}', space=sflag, size = 0x4, scoped, tag = 'scoped memory for tpu_custom_call.1']
    #allocation5 [shape = 'u8[1024]{0}', space=vmem, size = 0x400, scoped, tag = 'input window, operand 1, single buffered']
    #allocation6 [shape = 's32[1]{0}', space=sflag, size = 0x4, scoped, tag = 'scoped memory for tpu_custom_call.1']
    #allocation7 [shape = 'u8[2048]{0}', space=vmem, size = 0x800, scoped, tag = 'output window, operand 0, single buffered']
    %7 = vsyncpa [#allocation3], 0
    %8 = vsyncpa [#allocation6], 0
    %9 = vsyncpa [#allocation4], 0
    // Predicated region
    $region2: #{tpu_custom_call.1} parent=1 // pred_check
      _
    $region3: #{tpu_custom_call.1} parent=1 // pred_check_branch
      %11 = sbr.rel (0) target = $region5
    $region4: #{tpu_custom_call.1} parent=1 // pred_region
      %s13 = ssub.s32 64, 64
      %14 = vsyncadd [#allocation3], %s13
      %s16 = sshll.u32 [#allocation2], 4
      %s17 = int_to_ptr.vmem [resolvable:$true] %s16
      %19 = dma.hbm_to_vmem [thread:$0]  %s0, 64, %s17, [#allocation3]
    $region5: #{tpu_custom_call.1} parent=1 // pred_fallthru
      _
    // Predicated region
    $region6: #{tpu_custom_call.1} parent=1 // pred_check
      _
    $region7: #{tpu_custom_call.1} parent=1 // pred_check_branch
      %21 = sbr.rel (0) target = $region9
    $region8: #{tpu_custom_call.1} parent=1 // pred_region
      %s23 = ssub.s32 32, 32
      %24 = vsyncadd [#allocation6], %s23
      %s26 = sshll.u32 [#allocation5], 4
      %s27 = int_to_ptr.vmem [resolvable:$true] %s26
      %29 = dma.hbm_to_vmem [thread:$0]  %s1, 32, %s27, [#allocation6]
    $region9: #{tpu_custom_call.1} parent=1 // pred_fallthru
      _
    // Predicated region
    $region10: #{tpu_custom_call.1} parent=1 // pred_check
      _
    $region11: #{tpu_custom_call.1} parent=1 // pred_check_branch
      %31 = sbr.rel (0) target = $region13
    $region12: #{tpu_custom_call.1} parent=1 // pred_region
      %32 = dma.done [#allocation3], 64
    $region13: #{tpu_custom_call.1} parent=1 // pred_fallthru
      _
    // Predicated region
    $region14: #{tpu_custom_call.1} parent=1 // pred_check
      _
    $region15: #{tpu_custom_call.1} parent=1 // pred_check_branch
      %34 = sbr.rel (0) target = $region17
    $region16: #{tpu_custom_call.1} parent=1 // pred_region
      %35 = dma.done [#allocation6], 32
    $region17: #{tpu_custom_call.1} parent=1 // pred_fallthru
      _
    %v36 = vld [vmem:[#allocation2] sm:$0xf]
    %v37 = vld [vmem:[#allocation5] sm:$0x3]
    %v39 = vlaneseq
    %v40 = vshrl.u32 %v39, 7
    %v41 = vsub.s32 0, %v40
    %v42 = vrot.slane %v37, %v41
    %v43 = vlaneseq
    %v44 = vshrl.u32 %v43, 7
    %v45 = vsub.s32 1, %v44
    %v46 = vrot.slane %v37, %v45
    %v47 = vcombine.low %v42, %v46
    %v49 = vunpack.c.l.s4 1983009808
    %v50 = vunpack.c.0.s8 %v49
    %v51 = vlaneseq
    %v52 = vshrl.u32 %v51, 7
    %v53 = vsub.s32 %v50, %v52
    %v54 = vrot.slane %v47, %v53
    %v56 = vadd.f32 %v36, %v54
    %57 = vst [vmem:[#allocation7] sm:$0xf] %v56
    // Predicated region
    $region18: #{tpu_custom_call.1} parent=1 // pred_check
      _
    $region19: #{tpu_custom_call.1} parent=1 // pred_check_branch
      %59 = sbr.rel (0) target = $region21
    $region20: #{tpu_custom_call.1} parent=1 // pred_region
      %s61 = ssub.s32 64, 64
      %62 = vsyncadd [#allocation4], %s61
      %s64 = sshll.u32 [#allocation7], 4
      %s65 = int_to_ptr.vmem [resolvable:$true] %s64
      %67 = dma.vmem_to_hbm [thread:$0]  %s65, 64, %s2, [#allocation4]
    $region21: #{tpu_custom_call.1} parent=1 // pred_fallthru
      _
    // Predicated region
    $region22: #{tpu_custom_call.1} parent=1 // pred_check
      _
    $region23: #{tpu_custom_call.1} parent=1 // pred_check_branch
      %69 = sbr.rel (0) target = $region25
    $region24: #{tpu_custom_call.1} parent=1 // pred_region
      %70 = dma.done [#allocation4], 64
    $region25: #{tpu_custom_call.1} parent=1 // pred_fallthru
      _
    %71 = vsyncpa [#allocation3], 1
    %72 = vsyncpa [#allocation6], 1
    %73 = vsyncpa [#allocation4], 1

</llo_original>
